<compile_context>
chip_gen: v7x
topology: tpu7x:2x2x1
jax: 0.10.0
libtpu: 0.0.40
codegen_flags: <defaults>
</compile_context>

<pallas_src>
import functools

import jax
import jax.numpy as jnp
from jax.experimental import pallas as pl
from jax.experimental.pallas import tpu as pltpu

_LANE = 128
_SUBLANE = 8


def _round_up(n, m):
    return ((n + m - 1) // m) * m


def _pick_row_tile(n, max_tile=512):
    """Largest multiple of 8 that divides n and is <= max_tile (n if small)."""
    if n <= max_tile:
        return n
    c = (max_tile // _SUBLANE) * _SUBLANE
    while c >= _SUBLANE:
        if n % c == 0:
            return c
        c -= _SUBLANE
    return _SUBLANE


def _pick_lane_tile(n, max_tile=1024):
    """Largest multiple of 128 that divides n and is <= max_tile (n if small)."""
    if n <= max_tile:
        return n
    c = (max_tile // _LANE) * _LANE
    while c >= _LANE:
        if n % c == 0:
            return c
        c -= _LANE
    return _LANE


def _vmem_capacity_bytes():
    """Per-core VMEM capacity; conservative (v7x) fallback if query fails."""
    try:
        info = pltpu.get_tpu_info()
        cap = getattr(info, "vmem_capacity_bytes", None)
        if cap:
            return int(cap)
    except Exception:
        pass
    return 64 * 1024 * 1024


def _resident_spec(block_shape, *, single_buffer):
    """BlockSpec for a grid-invariant (constant index_map) input.

    With single_buffer=True the block lives in ONE VMEM buffer (DMA'd from HBM
    exactly once); otherwise the default double-buffered spec is used (still
    DMA'd once — the pipeline skips re-fetch when the block index is constant —
    but at 2x the VMEM footprint).
    """
    index_map = lambda *_: (0,) * len(block_shape)
    if single_buffer:
        return pl.BlockSpec(block_shape, index_map, pipeline_mode=pl.Buffered(1))
    return pl.BlockSpec(block_shape, index_map)


# ---------------------------------------------------------------------------
# Kernel 1: feature transform  xw = x @ W^T  (tiny matmul, run once per layer)
# W is pre-transposed + lane-padded in the wrapper, so no in-kernel transpose.
# ---------------------------------------------------------------------------
def _feature_transform_kernel(x_ref, wt_ref, o_ref):
    o_ref[...] = jnp.dot(
        x_ref[...], wt_ref[...], preferred_element_type=jnp.float32
    ).astype(o_ref.dtype)


def feature_transform(x, wt, *, tile_m, vmem_limit, single_buffer):
    n, f_in = x.shape
    f_out = wt.shape[1]
    flops = 2 * n * f_in * f_out
    bytes_accessed = (n * f_in + f_in * f_out + n * f_out) * 2
    return pl.pallas_call(
        _feature_transform_kernel,
        out_shape=jax.ShapeDtypeStruct((n, f_out), jnp.bfloat16),
        grid_spec=pltpu.PrefetchScalarGridSpec(
            num_scalar_prefetch=0,
            grid=(n // tile_m,),
            in_specs=[
                pl.BlockSpec((tile_m, f_in), lambda i: (i, 0)),
                _resident_spec((f_in, f_out), single_buffer=single_buffer),
            ],
            out_specs=pl.BlockSpec((tile_m, f_out), lambda i: (i, 0)),
        ),
        compiler_params=pltpu.CompilerParams(
            dimension_semantics=("parallel",),
            vmem_limit_bytes=vmem_limit),
        cost_estimate=pl.CostEstimate(
            flops=flops, transcendentals=0, bytes_accessed=bytes_accessed),
    )(x, wt)


# ---------------------------------------------------------------------------
# Kernel 2: fused two-layer GCN (h1 never leaves VMEM).
#   grid = (phase, row_tile); phase 0 writes h1 into a VMEM scratch,
#   phase 1 computes out = (adj_rows @ h1) @ W2^T + b2.
#   adj_resident=True : adj is a single (N, N) VMEM-resident block (1 HBM read)
#   adj_resident=False: adj is streamed as (tile_n, N) row strips (2 HBM reads)
#   Output index_map (i*p, 0): all phase-0 steps park on output block 0, which
#   is rewritten by phase-1 i=0 before its only HBM writeback -> no zero-fill,
#   no doubled writeback, only consecutive revisits.
#   Both grid axes are "arbitrary": the h1 scratch is shared across tiles and
#   phase 1 depends on every tile of phase 0 (no megacore split of the grid).
# ---------------------------------------------------------------------------
def _gcn_fused_kernel(adj_ref, xw1_ref, w2t_ref, b1_ref, b2_ref,
                      o_ref, h1_ref, *, tile_n, adj_resident):
    phase = pl.program_id(0)
    i = pl.program_id(1)
    row = pl.multiple_of(i * tile_n, tile_n)

    def adj_rows():
        if adj_resident:
            return adj_ref[pl.ds(row, tile_n), :]
        return adj_ref[...]

    @pl.when(phase == 0)
    def _():
        # Layer 1 aggregation for this row tile: h1 = elu(adj_rows @ xw1 + b1)
        y = jnp.dot(adj_rows(), xw1_ref[...], preferred_element_type=jnp.float32)
        y = y + b1_ref[...]
        y = jnp.where(y > 0, y, jnp.expm1(y))          # ELU, alpha = 1
        h1_ref[pl.ds(row, tile_n), :] = y.astype(h1_ref.dtype)

    @pl.when(phase == 1)
    def _():
        # Layer 2: (adj_rows @ h1) @ W2^T + b2
        ah1 = jnp.dot(adj_rows(), h1_ref[...], preferred_element_type=jnp.float32)
        y = jnp.dot(ah1.astype(w2t_ref.dtype), w2t_ref[...],
                    preferred_element_type=jnp.float32)
        o_ref[...] = (y + b2_ref[...]).astype(o_ref.dtype)


def gcn_fused(adj, xw1, w2t, b1, b2, *, tile_n, adj_resident, vmem_limit,
              single_buffer):
    n = adj.shape[0]
    hpad = xw1.shape[1]
    opad = w2t.shape[1]
    kernel = functools.partial(_gcn_fused_kernel, tile_n=tile_n,
                               adj_resident=adj_resident)
    if adj_resident:
        adj_spec = _resident_spec((n, n), single_buffer=single_buffer)
        adj_reads = 1
    else:
        adj_spec = pl.BlockSpec((tile_n, n), lambda p, i: (i, 0))
        adj_reads = 2
    flops = 4 * n * n * hpad + 2 * n * hpad * opad
    bytes_accessed = (adj_reads * n * n * 2 + n * hpad * 2
                      + hpad * opad * 2 + n * opad * 4)
    return pl.pallas_call(
        kernel,
        out_shape=jax.ShapeDtypeStruct((n, opad), jnp.float32),
        grid_spec=pltpu.PrefetchScalarGridSpec(
            num_scalar_prefetch=0,
            grid=(2, n // tile_n),
            in_specs=[
                adj_spec,
                _resident_spec((n, hpad), single_buffer=single_buffer),   # xw1
                _resident_spec((hpad, opad), single_buffer=single_buffer),  # W2^T
                _resident_spec((1, hpad), single_buffer=single_buffer),   # b1
                _resident_spec((1, opad), single_buffer=single_buffer),   # b2
            ],
            out_specs=pl.BlockSpec((tile_n, opad), lambda p, i: (i * p, 0)),
            scratch_shapes=[pltpu.VMEM((n, hpad), jnp.bfloat16)],  # h1
        ),
        compiler_params=pltpu.CompilerParams(
            dimension_semantics=("arbitrary", "arbitrary"),
            vmem_limit_bytes=vmem_limit),
        cost_estimate=pl.CostEstimate(
            flops=flops, transcendentals=n * hpad,
            bytes_accessed=bytes_accessed),
    )(adj, xw1, w2t, b1, b2)


# ---------------------------------------------------------------------------
# Kernel 3: K-blocked aggregation  out = maybe_elu(adj @ xw + b)
#   (fallback for graphs whose h1 scratch would not fit in VMEM)
#   xw_resident=True keeps the whole (N, fpad) xw in VMEM (sliced per K block)
#   so it is not re-streamed from HBM for every row tile.
# ---------------------------------------------------------------------------
def _adj_aggregate_kernel(adj_ref, xw_ref, b_ref, o_ref, acc_ref, *,
                          apply_elu, tile_k, xw_resident):
    k = pl.program_id(1)

    @pl.when(k == 0)
    def _():
        acc_ref[...] = jnp.zeros_like(acc_ref)

    if xw_resident:
        col = pl.multiple_of(k * tile_k, tile_k)
        xw = xw_ref[pl.ds(col, tile_k), :]
    else:
        xw = xw_ref[...]
    acc_ref[...] += jnp.dot(adj_ref[...], xw, preferred_element_type=jnp.float32)

    @pl.when(k == pl.num_programs(1) - 1)
    def _():
        y = acc_ref[...] + b_ref[...]
        if apply_elu:
            y = jnp.where(y > 0, y, jnp.expm1(y))
        o_ref[...] = y.astype(o_ref.dtype)


def adj_aggregate(adj, xw, b, *, apply_elu, out_dtype, tile_n, tile_k,
                  xw_resident, vmem_limit, single_buffer):
    n = adj.shape[0]
    fpad = xw.shape[1]
    kernel = functools.partial(_adj_aggregate_kernel, apply_elu=apply_elu,
                               tile_k=tile_k, xw_resident=xw_resident)
    if xw_resident:
        xw_spec = _resident_spec((n, fpad), single_buffer=single_buffer)
        xw_read_elems = n * fpad
    else:
        xw_spec = pl.BlockSpec((tile_k, fpad), lambda i, k: (k, 0))
        xw_read_elems = (n // tile_n) * n * fpad
    out_bytes = jnp.dtype(out_dtype).itemsize
    flops = 2 * n * n * fpad
    bytes_accessed = n * n * 2 + xw_read_elems * 2 + n * fpad * out_bytes
    return pl.pallas_call(
        kernel,
        out_shape=jax.ShapeDtypeStruct((n, fpad), out_dtype),
        grid_spec=pltpu.PrefetchScalarGridSpec(
            num_scalar_prefetch=0,
            grid=(n // tile_n, n // tile_k),   # reduction axis last
            in_specs=[
                pl.BlockSpec((tile_n, tile_k), lambda i, k: (i, k)),
                xw_spec,
                _resident_spec((1, fpad), single_buffer=single_buffer),
            ],
            out_specs=pl.BlockSpec((tile_n, fpad), lambda i, k: (i, 0)),
            scratch_shapes=[pltpu.VMEM((tile_n, fpad), jnp.float32)],
        ),
        compiler_params=pltpu.CompilerParams(
            dimension_semantics=("parallel", "arbitrary"),
            vmem_limit_bytes=vmem_limit),
        cost_estimate=pl.CostEstimate(
            flops=flops,
            transcendentals=(n * fpad if apply_elu else 0),
            bytes_accessed=int(bytes_accessed)),
    )(adj, xw, b)


# ---------------------------------------------------------------------------
# Forward pass
# ---------------------------------------------------------------------------
def _gcn_forward(adj, h, params, *, mode, single_buffer):
    w1, b1, w2, b2 = params
    n = adj.shape[0]
    in_dim = h.shape[1]
    hidden_dim = w1.shape[0]
    out_dim = w2.shape[0]

    n_pad = _round_up(n, _LANE)
    ipad = _round_up(in_dim, _LANE)
    hpad = _round_up(hidden_dim, _LANE)
    opad = _round_up(out_dim, _LANE)

    # Pad + pre-transpose + cast ONCE, building the padded buffers directly in
    # the bf16 streaming dtype (no f32 n_pad^2 intermediate).  Biases stay f32.
    adj_p = jnp.zeros((n_pad, n_pad), jnp.bfloat16).at[:n, :n].set(
        adj.astype(jnp.bfloat16))
    h_p = jnp.zeros((n_pad, ipad), jnp.bfloat16).at[:n, :in_dim].set(
        h.astype(jnp.bfloat16))
    w1t = jnp.zeros((ipad, hpad), jnp.bfloat16).at[:in_dim, :hidden_dim].set(
        w1.T.astype(jnp.bfloat16))
    w2t = jnp.zeros((hpad, opad), jnp.bfloat16).at[:hidden_dim, :out_dim].set(
        w2.T.astype(jnp.bfloat16))
    b1p = jnp.zeros((1, hpad), jnp.float32).at[0, :hidden_dim].set(b1)
    b2p = jnp.zeros((1, opad), jnp.float32).at[0, :out_dim].set(b2)

    vmem_cap = _vmem_capacity_bytes()
    vmem_limit = int(vmem_cap * 0.85)
    headroom = 4 << 20                       # Mosaic internal scratch, etc.
    buf = 1 if single_buffer else 2          # resident-input buffer count

    tile_n = _pick_row_tile(n_pad)
    tile_m = tile_n

    # Layer-1 feature transform (tiny), shared by all paths.
    xw1 = feature_transform(h_p, w1t, tile_m=tile_m, vmem_limit=vmem_limit,
                            single_buffer=single_buffer)

    # VMEM footprints of the fused variants.
    common = ((buf + 1) * n_pad * hpad * 2       # xw1 (resident) + h1 scratch
              + buf * hpad * opad * 2            # W2^T
              + 2 * tile_n * opad * 4)           # double-buffered f32 out tiles
    full_bytes = common + buf * n_pad * n_pad * 2       # adj fully resident
    semi_bytes = common + 2 * tile_n * n_pad * 2        # adj row strips (2 bufs)

    if mode == "auto":
        if full_bytes + headroom <= vmem_limit:
            mode = "fused"
        elif semi_bytes + headroom <= vmem_limit:
            mode = "semi"
        else:
            mode = "tiled"

    if mode in ("fused", "semi"):
        out_p = gcn_fused(adj_p, xw1, w2t, b1p, b2p, tile_n=tile_n,
                          adj_resident=(mode == "fused"),
                          vmem_limit=vmem_limit, single_buffer=single_buffer)
    else:
        # Very-large-graph path: adj streamed K-blocked so VMEM is bounded
        # independently of N.  h1 makes one bf16 HBM round trip.
        tile_k = _pick_lane_tile(n_pad)
        fmax = max(hpad, opad)
        xw_resident = (buf * n_pad * fmax * 2 + 2 * tile_n * tile_k * 2
                       + 3 * tile_n * fmax * 4 + headroom) <= vmem_limit
        h1 = adj_aggregate(adj_p, xw1, b1p, apply_elu=True,
                           out_dtype=jnp.bfloat16, tile_n=tile_n,
                           tile_k=tile_k, xw_resident=xw_resident,
                           vmem_limit=vmem_limit, single_buffer=single_buffer)
        xw2 = feature_transform(h1, w2t, tile_m=tile_m, vmem_limit=vmem_limit,
                                single_buffer=single_buffer)
        out_p = adj_aggregate(adj_p, xw2, b2p, apply_elu=False,
                              out_dtype=jnp.float32, tile_n=tile_n,
                              tile_k=tile_k, xw_resident=xw_resident,
                              vmem_limit=vmem_limit, single_buffer=single_buffer)

    return out_p[:n, :out_dim]


def gcn_forward(adj, h, params, *, mode="auto"):
    """mode: "auto" | "fused" (adj resident) | "semi" (adj streamed) | "tiled"."""
    try:
        return _gcn_forward(adj, h, params, mode=mode, single_buffer=True)
    except Exception:
        # pl.Buffered(1) single-buffered resident inputs unavailable on this
        # jax/libtpu build; retry with default double-buffered BlockSpecs.
        return _gcn_forward(adj, h, params, mode=mode, single_buffer=False)


def init_params(key, in_dim, hidden_dim, out_dim):
    """PyTorch-style nn.Linear init: U(-1/sqrt(fan_in), 1/sqrt(fan_in))."""
    k1, k2, k3, k4 = jax.random.split(key, 4)
    lim1 = 1.0 / jnp.sqrt(in_dim)
    lim2 = 1.0 / jnp.sqrt(hidden_dim)
    w1 = jax.random.uniform(k1, (hidden_dim, in_dim), jnp.float32, -lim1, lim1)
    b1 = jax.random.uniform(k2, (hidden_dim,), jnp.float32, -lim1, lim1)
    w2 = jax.random.uniform(k3, (out_dim, hidden_dim), jnp.float32, -lim2, lim2)
    b2 = jax.random.uniform(k4, (out_dim,), jnp.float32, -lim2, lim2)
    return w1, b1, w2, b2


if __name__ == "__main__":
    # Small graph: N=128 nodes, in_dim=64 features, hidden=32, out_dim=8.
    N, IN_DIM, HIDDEN_DIM, OUT_DIM = 128, 64, 32, 8

    key = jax.random.PRNGKey(0)
    k_adj, k_feat, k_par = jax.random.split(key, 3)

    # Symmetric, row-normalized dense adjacency (typical GCN preprocessing).
    a = jax.random.uniform(k_adj, (N, N), jnp.float32)
    a = (a + a.T) * 0.5 + jnp.eye(N, dtype=jnp.float32)
    adj = a / jnp.sum(a, axis=1, keepdims=True)

    feats = jax.random.normal(k_feat, (N, IN_DIM), jnp.float32)
    params = init_params(k_par, IN_DIM, HIDDEN_DIM, OUT_DIM)

    # Exercise all three execution paths (auto -> adj-resident fused here).
    out_fused = jax.block_until_ready(gcn_forward(adj, feats, params))
    out_semi = jax.block_until_ready(gcn_forward(adj, feats, params, mode="semi"))
    out_tiled = jax.block_until_ready(gcn_forward(adj, feats, params, mode="tiled"))

    # Pure-JAX f32 reference (dropout = identity).
    w1, b1, w2, b2 = params
    ref1 = (adj @ feats) @ w1.T + b1
    ref1 = jnp.where(ref1 > 0, ref1, jnp.expm1(ref1))
    ref = (adj @ ref1) @ w2.T + b2

    # bf16 streaming with f32 accumulation -> loosen tolerance vs f32 ref.
    for out in (out_fused, out_semi, out_tiled):
        assert out.shape == (N, OUT_DIM)
        assert jnp.allclose(out, ref, atol=2e-2, rtol=2e-2)
    assert jnp.allclose(out_fused, out_semi, atol=2e-2, rtol=2e-2)
    assert jnp.allclose(out_fused, out_tiled, atol=2e-2, rtol=2e-2)

    print("KERNEL_OK")
</pallas_src>

<mosaic_0001>
module attributes {stable_mosaic.version = 11 : i64} {
  func.func @_feature_transform_kernel(%arg0: i32, %arg1: memref<128x128xbf16, #tpu.memory_space<vmem>>, %arg2: memref<128x128xbf16, #tpu.memory_space<vmem>>, %arg3: memref<128x128xbf16, #tpu.memory_space<vmem>>) attributes {dimension_semantics = [#tpu.dimension_semantics<parallel>], iteration_bounds = array<i64: 1>, scalar_prefetch = 0 : i64, scratch_operands = 0 : i64, tpu.core_type = #tpu.core_type<tc>, window_params = [{transform_indices = @transform_0, window_bounds = array<i64: 128, 128>}, {pipeline_mode = #tpu.pipeline_mode<synchronous>, transform_indices = @transform_1, window_bounds = array<i64: 128, 128>}, {transform_indices = @transform_2, window_bounds = array<i64: 128, 128>}]} {
    %c0 = arith.constant 0 : index
    %c0_0 = arith.constant 0 : index
    %0 = vector.load %arg1[%c0, %c0_0] : memref<128x128xbf16, #tpu.memory_space<vmem>>, vector<128x128xbf16>
    %c0_1 = arith.constant 0 : index
    %c0_2 = arith.constant 0 : index
    %1 = vector.load %arg2[%c0_1, %c0_2] : memref<128x128xbf16, #tpu.memory_space<vmem>>, vector<128x128xbf16>
    %cst = arith.constant dense<0.000000e+00> : vector<128x128xf32>
    %2 = tpu.matmul %0, %1, %cst {dimension_numbers = #tpu.dot_dimension_numbers<[1], [0], [0], [1], [0, 0, 1, 1], [], []>} : vector<128x128xbf16>, vector<128x128xbf16>, vector<128x128xf32> -> vector<128x128xf32>
    %3 = arith.truncf %2 : vector<128x128xf32> to vector<128x128xbf16>
    %c0_3 = arith.constant 0 : index
    %c0_4 = arith.constant 0 : index
    %4 = vector.load %arg3[%c0_3, %c0_4] : memref<128x128xbf16, #tpu.memory_space<vmem>>, vector<128x128xbf16>
    tpu.vector_store %arg3[%c0_3, %c0_4], %3 {strides = array<i32>} : memref<128x128xbf16, #tpu.memory_space<vmem>>, vector<128x128xbf16>,
    return
  }
  func.func @transform_0(%arg0: i32) -> (i32, i32) {
    %c0_i32 = arith.constant 0 : i32
    %c0_i32_0 = arith.constant 0 : i32
    return %arg0, %c0_i32 : i32, i32
  }
  func.func @transform_1(%arg0: i32) -> (i32, i32) {
    %c0_i32 = arith.constant 0 : i32
    %c0_i32_0 = arith.constant 0 : i32
    %c0_i32_1 = arith.constant 0 : i32
    return %c0_i32, %c0_i32_0 : i32, i32
  }
  func.func @transform_2(%arg0: i32) -> (i32, i32) {
    %c0_i32 = arith.constant 0 : i32
    %c0_i32_0 = arith.constant 0 : i32
    return %arg0, %c0_i32 : i32, i32
  }
}

module attributes {stable_mosaic.version = 11 : i64} {
  func.func @_feature_transform_kernel(%arg0: i32, %arg1: memref<128x128xbf16, #tpu.memory_space<vmem>>, %arg2: memref<128x128xbf16, #tpu.memory_space<vmem>>, %arg3: memref<128x128xbf16, #tpu.memory_space<vmem>>) attributes {dimension_semantics = [#tpu.dimension_semantics<parallel>], iteration_bounds = array<i64: 1>, scalar_prefetch = 0 : i64, scratch_operands = 0 : i64, tpu.core_type = #tpu.core_type<tc>, window_params = [{transform_indices = @transform_0, window_bounds = array<i64: 128, 128>}, {pipeline_mode = #tpu.pipeline_mode<synchronous>, transform_indices = @transform_1, window_bounds = array<i64: 128, 128>}, {transform_indices = @transform_2, window_bounds = array<i64: 128, 128>}]} {
    %c0 = arith.constant 0 : index
    %c0_0 = arith.constant 0 : index
    %0 = vector.load %arg1[%c0, %c0_0] : memref<128x128xbf16, #tpu.memory_space<vmem>>, vector<128x128xbf16>
    %c0_1 = arith.constant 0 : index
    %c0_2 = arith.constant 0 : index
    %1 = vector.load %arg2[%c0_1, %c0_2] : memref<128x128xbf16, #tpu.memory_space<vmem>>, vector<128x128xbf16>
    %cst = arith.constant dense<0.000000e+00> : vector<128x128xf32>
    %2 = tpu.matmul %0, %1, %cst {dimension_numbers = #tpu.dot_dimension_numbers<[1], [0], [0], [1], [0, 0, 1, 1], [], []>} : vector<128x128xbf16>, vector<128x128xbf16>, vector<128x128xf32> -> vector<128x128xf32>
    %3 = arith.truncf %2 : vector<128x128xf32> to vector<128x128xbf16>
    %c0_3 = arith.constant 0 : index
    %c0_4 = arith.constant 0 : index
    %4 = vector.load %arg3[%c0_3, %c0_4] : memref<128x128xbf16, #tpu.memory_space<vmem>>, vector<128x128xbf16>
    tpu.vector_store %arg3[%c0_3, %c0_4], %3 {strides = array<i32>} : memref<128x128xbf16, #tpu.memory_space<vmem>>, vector<128x128xbf16>,
    return
  }
  func.func @transform_0(%arg0: i32) -> (i32, i32) {
    %c0_i32 = arith.constant 0 : i32
    %c0_i32_0 = arith.constant 0 : i32
    return %arg0, %c0_i32 : i32, i32
  }
  func.func @transform_1(%arg0: i32) -> (i32, i32) {
    %c0_i32 = arith.constant 0 : i32
    %c0_i32_0 = arith.constant 0 : i32
    %c0_i32_1 = arith.constant 0 : i32
    return %c0_i32, %c0_i32_0 : i32, i32
  }
  func.func @transform_2(%arg0: i32) -> (i32, i32) {
    %c0_i32 = arith.constant 0 : i32
    %c0_i32_0 = arith.constant 0 : i32
    return %arg0, %c0_i32 : i32, i32
  }
}

</mosaic_0001>

<llo_original>
// kernel: tpu_custom_call.1
$region0: #{tpu_custom_call.1}
  #allocation0 [shape = 'u32[]', space=smem, size = 0x4, offset = 0x4, fixed_abs, tag = 'smem constant byte address 0x4 - core index']
  #allocation1 [shape = 'u32[144,128]{1,0:T(1,128)}', space=vmem, size = 0x12000, scoped, tag = 'internal scratch']
  %s0 = inlined_call_operand.hbm [shape: bf16[128,128], index: 0, kind: input, shape index: {}]
  %s1 = inlined_call_operand.hbm [shape: bf16[128,128], index: 1, kind: input, shape index: {}]
  %s2 = inlined_call_operand.hbm [shape: bf16[128,128], index: 2, kind: output, shape index: {}]
  %s3 = sld [smem:[#allocation0]]
  $region26: #{tpu_custom_call.1} parent=0
    _
  %s5 = ssub.s32 1, %s3
  %s6 = scalar_select 0, %s5, %s3
  $region1: #{tpu_custom_call.1} parent=0
    #allocation2 [shape = 'u8[32768]{0}', space=vmem, size = 0x8000, scoped, tag = 'input window, operand 0, single buffered']
    #allocation3 [shape = 's32[1]{0}', space=sflag, size = 0x4, scoped, tag = 'scoped memory for tpu_custom_call.1']
    #allocation4 [shape = 's32[1]{0}', space=sflag, size = 0x4, scoped, tag = 'scoped memory for tpu_custom_call.1']
    #allocation5 [shape = 'u8[32768]{0}', space=vmem, size = 0x8000, scoped, tag = 'input window, operand 1, single buffered']
    #allocation6 [shape = 's32[1]{0}', space=sflag, size = 0x4, scoped, tag = 'scoped memory for tpu_custom_call.1']
    #allocation7 [shape = 'u8[32768]{0}', space=vmem, size = 0x8000, scoped, tag = 'output window, operand 0, single buffered']
    %7 = vsyncpa [#allocation3], 0
    %8 = vsyncpa [#allocation6], 0
    %9 = vsyncpa [#allocation4], 0
    // Predicated region
    $region2: #{tpu_custom_call.1} parent=1 // pred_check
      _
    $region3: #{tpu_custom_call.1} parent=1 // pred_check_branch
      %11 = sbr.rel (0) target = $region5
    $region4: #{tpu_custom_call.1} parent=1 // pred_region
      %s13 = ssub.s32 1024, 1024
      %14 = vsyncadd [#allocation3], %s13
      %s15 = sshll.u32 [#allocation2], 4
      %s16 = int_to_ptr.vmem [resolvable:$true] %s15
      %21 = dma.hbm_to_vmem [thread:$0]  %s0, 1024, %s16, [#allocation3], 64, 64, 4
    $region5: #{tpu_custom_call.1} parent=1 // pred_fallthru
      _
    // Predicated region
    $region6: #{tpu_custom_call.1} parent=1 // pred_check
      _
    $region7: #{tpu_custom_call.1} parent=1 // pred_check_branch
      %23 = sbr.rel (0) target = $region9
    $region8: #{tpu_custom_call.1} parent=1 // pred_region
      %s25 = ssub.s32 1024, 1024
      %26 = vsyncadd [#allocation6], %s25
      %s27 = sshll.u32 [#allocation5], 4
      %s28 = int_to_ptr.vmem [resolvable:$true] %s27
      %33 = dma.hbm_to_vmem [thread:$0]  %s1, 1024, %s28, [#allocation6], 64, 64, 4
    $region9: #{tpu_custom_call.1} parent=1 // pred_fallthru
      _
    // Predicated region
    $region10: #{tpu_custom_call.1} parent=1 // pred_check
      _
    $region11: #{tpu_custom_call.1} parent=1 // pred_check_branch
      %35 = sbr.rel (0) target = $region13
    $region12: #{tpu_custom_call.1} parent=1 // pred_region
      %36 = dma.done [#allocation3], 1024
    $region13: #{tpu_custom_call.1} parent=1 // pred_fallthru
      _
    // Predicated region
    $region14: #{tpu_custom_call.1} parent=1 // pred_check
      _
    $region15: #{tpu_custom_call.1} parent=1 // pred_check_branch
      %38 = sbr.rel (0) target = $region17
    $region16: #{tpu_custom_call.1} parent=1 // pred_region
      %39 = dma.done [#allocation6], 1024
    $region17: #{tpu_custom_call.1} parent=1 // pred_fallthru
      _
    %v41 = vld [vmem:[#allocation2] sm:$0xf]
    %v42 = vld [vmem:[#allocation2 + $0x4] sm:$0xf]
    %v43 = vld [vmem:[#allocation2 + $0x8] sm:$0xf]
    %v44 = vld [vmem:[#allocation2 + $0xc] sm:$0xf]
    %v45 = vld [vmem:[#allocation2 + $0x10] sm:$0xf]
    %v46 = vld [vmem:[#allocation2 + $0x14] sm:$0xf]
    %v47 = vld [vmem:[#allocation2 + $0x18] sm:$0xf]
    %v48 = vld [vmem:[#allocation2 + $0x1c] sm:$0xf]
    %v49 = vld [vmem:[#allocation2 + $0x20] sm:$0xf]
    %v50 = vld [vmem:[#allocation2 + $0x24] sm:$0xf]
    %v51 = vld [vmem:[#allocation2 + $0x28] sm:$0xf]
    %v52 = vld [vmem:[#allocation2 + $0x2c] sm:$0xf]
    %v53 = vld [vmem:[#allocation2 + $0x30] sm:$0xf]
    %v54 = vld [vmem:[#allocation2 + $0x34] sm:$0xf]
    %v55 = vld [vmem:[#allocation2 + $0x38] sm:$0xf]
    %v56 = vld [vmem:[#allocation2 + $0x3c] sm:$0xf]
    %v57 = vld [vmem:[#allocation5] sm:$0xf]
    %v58 = vld [vmem:[#allocation5 + $0x4] sm:$0xf]
    %v59 = vld [vmem:[#allocation5 + $0x8] sm:$0xf]
    %v60 = vld [vmem:[#allocation5 + $0xc] sm:$0xf]
    %v61 = vld [vmem:[#allocation5 + $0x10] sm:$0xf]
    %v62 = vld [vmem:[#allocation5 + $0x14] sm:$0xf]
    %v63 = vld [vmem:[#allocation5 + $0x18] sm:$0xf]
    %v64 = vld [vmem:[#allocation5 + $0x1c] sm:$0xf]
    %v65 = vld [vmem:[#allocation5 + $0x20] sm:$0xf]
    %v66 = vld [vmem:[#allocation5 + $0x24] sm:$0xf]
    %v67 = vld [vmem:[#allocation5 + $0x28] sm:$0xf]
    %v68 = vld [vmem:[#allocation5 + $0x2c] sm:$0xf]
    %v69 = vld [vmem:[#allocation5 + $0x30] sm:$0xf]
    %v70 = vld [vmem:[#allocation5 + $0x34] sm:$0xf]
    %v71 = vld [vmem:[#allocation5 + $0x38] sm:$0xf]
    %v72 = vld [vmem:[#allocation5 + $0x3c] sm:$0xf]
    %v89 = vunpack.c.l.b16 %v41
    %v90 = vunpack.c.l.b16 %v42
    %v91 = vunpack.c.l.b16 %v43
    %v92 = vunpack.c.l.b16 %v44
    %v93 = vunpack.c.l.b16 %v45
    %v94 = vunpack.c.l.b16 %v46
    %v95 = vunpack.c.l.b16 %v47
    %v96 = vunpack.c.l.b16 %v48
    %v97 = vunpack.c.l.b16 %v49
    %v98 = vunpack.c.l.b16 %v50
    %v99 = vunpack.c.l.b16 %v51
    %v100 = vunpack.c.l.b16 %v52
    %v101 = vunpack.c.l.b16 %v53
    %v102 = vunpack.c.l.b16 %v54
    %v103 = vunpack.c.l.b16 %v55
    %v104 = vunpack.c.l.b16 %v56
    %v105 = vpack.c.b16 %v90, %v89
    %v106 = vpack.c.b16 %v92, %v91
    %v107 = vpack.c.b16 %v94, %v93
    %v108 = vpack.c.b16 %v96, %v95
    %v109 = vpack.c.b16 %v98, %v97
    %v110 = vpack.c.b16 %v100, %v99
    %v111 = vpack.c.b16 %v102, %v101
    %v112 = vpack.c.b16 %v104, %v103
    %v137 = vunpack.c.l.b16 %v57
    %v138 = vunpack.c.l.b16 %v58
    %v139 = vunpack.c.l.b16 %v59
    %v140 = vunpack.c.l.b16 %v60
    %v141 = vunpack.c.l.b16 %v61
    %v142 = vunpack.c.l.b16 %v62
    %v143 = vunpack.c.l.b16 %v63
    %v144 = vunpack.c.l.b16 %v64
    %v145 = vunpack.c.l.b16 %v65
    %v146 = vunpack.c.l.b16 %v66
    %v147 = vunpack.c.l.b16 %v67
    %v148 = vunpack.c.l.b16 %v68
    %v149 = vunpack.c.l.b16 %v69
    %v150 = vunpack.c.l.b16 %v70
    %v151 = vunpack.c.l.b16 %v71
    %v152 = vunpack.c.l.b16 %v72
    %v153 = vpack.c.b16 %v138, %v137
    %v154 = vpack.c.b16 %v140, %v139
    %v155 = vpack.c.b16 %v142, %v141
    %v156 = vpack.c.b16 %v144, %v143
    %v157 = vpack.c.b16 %v146, %v145
    %v158 = vpack.c.b16 %v148, %v147
    %v159 = vpack.c.b16 %v150, %v149
    %v160 = vpack.c.b16 %v152, %v151
    %169 = vmatprep.subr.bf16.mxu0 0
    %170 = vmatpush1.bf16.msra.mxu0 %v153
    %171 = vmatprep.subr.bf16.mxu0 0
    %172 = vmatpush1.bf16.msra.mxu0 %v154
    %173 = vmatprep.subr.bf16.mxu0 0
    %174 = vmatpush1.bf16.msra.mxu0 %v155
    %175 = vmatprep.subr.bf16.mxu0 0
    %176 = vmatpush1.bf16.msra.mxu0 %v156
    %177 = vmatprep.subr.bf16.mxu0 0
    %178 = vmatpush1.bf16.msra.mxu0 %v157
    %179 = vmatprep.subr.bf16.mxu0 0
    %180 = vmatpush1.bf16.msra.mxu0 %v158
    %181 = vmatprep.subr.bf16.mxu0 0
    %182 = vmatpush1.bf16.msra.mxu0 %v159
    %183 = vmatprep.subr.bf16.mxu0 0
    %184 = vmatpush1.bf16.msra.mxu0 %v160
    %185 = vmatprep.subr.bf16.mxu0 0
    %186 = vmatpush1.bf16.msra.mxu0 0
    %187 = vmatprep.subr.bf16.mxu0 0
    %188 = vmatpush1.bf16.msra.mxu0 0
    %189 = vmatprep.subr.bf16.mxu0 0
    %190 = vmatpush1.bf16.msra.mxu0 0
    %191 = vmatprep.subr.bf16.mxu0 0
    %192 = vmatpush1.bf16.msra.mxu0 0
    %193 = vmatprep.subr.bf16.mxu0 0
    %194 = vmatpush1.bf16.msra.mxu0 0
    %195 = vmatprep.subr.bf16.mxu0 0
    %196 = vmatpush1.bf16.msra.mxu0 0
    %197 = vmatprep.subr.bf16.mxu0 0
    %198 = vmatpush1.bf16.msra.mxu0 0
    %199 = vmatprep.subr.bf16.mxu0 0
    %200 = vmatpush1.bf16.msra.mxu0 0
    %201 = vmatprep.mubr.bf16.mxu0 0
    %202 = vmatmul.mubr.bf16.gmra.mrb[0].mxu0 %v105
    %v203 = vpop.f32.mrb[0].mxu0
    %v204 = vadd.f32 0.0, %v203
    %v205 = vpop.f32.mrb[0].mxu0
    %v206 = vpop.f32.mrb[0].mxu0
    %v207 = vadd.f32 0.0, %v206
    %v208 = vpop.f32.mrb[0].mxu0
    %209 = vmatprep.mubr.bf16.mxu0 0
    %210 = vmatmul.mubr.bf16.gmra.mrb[0].mxu0 %v106
    %v211 = vpop.f32.mrb[0].mxu0
    %v212 = vadd.f32 0.0, %v211
    %v213 = vpop.f32.mrb[0].mxu0
    %v214 = vpop.f32.mrb[0].mxu0
    %v215 = vadd.f32 0.0, %v214
    %v216 = vpop.f32.mrb[0].mxu0
    %217 = vmatprep.mubr.bf16.mxu0 0
    %218 = vmatmul.mubr.bf16.gmra.mrb[0].mxu0 %v107
    %v219 = vpop.f32.mrb[0].mxu0
    %v220 = vadd.f32 0.0, %v219
    %v221 = vpop.f32.mrb[0].mxu0
    %v222 = vpop.f32.mrb[0].mxu0
    %v223 = vadd.f32 0.0, %v222
    %v224 = vpop.f32.mrb[0].mxu0
    %225 = vmatprep.mubr.bf16.mxu0 0
    %226 = vmatmul.mubr.bf16.gmra.mrb[0].mxu0 %v108
    %v227 = vpop.f32.mrb[0].mxu0
    %v228 = vadd.f32 0.0, %v227
    %v229 = vpop.f32.mrb[0].mxu0
    %v230 = vpop.f32.mrb[0].mxu0
    %v231 = vadd.f32 0.0, %v230
    %v232 = vpop.f32.mrb[0].mxu0
    %233 = vmatprep.mubr.bf16.mxu0 0
    %234 = vmatmul.mubr.bf16.gmra.mrb[0].mxu0 %v109
    %v235 = vpop.f32.mrb[0].mxu0
    %v236 = vadd.f32 0.0, %v235
    %v237 = vpop.f32.mrb[0].mxu0
    %v238 = vpop.f32.mrb[0].mxu0
    %v239 = vadd.f32 0.0, %v238
    %v240 = vpop.f32.mrb[0].mxu0
    %241 = vmatprep.mubr.bf16.mxu0 0
    %242 = vmatmul.mubr.bf16.gmra.mrb[0].mxu0 %v110
    %v243 = vpop.f32.mrb[0].mxu0
    %v244 = vadd.f32 0.0, %v243
    %v245 = vpop.f32.mrb[0].mxu0
    %v246 = vpop.f32.mrb[0].mxu0
    %v247 = vadd.f32 0.0, %v246
    %v248 = vpop.f32.mrb[0].mxu0
    %249 = vmatprep.mubr.bf16.mxu0 0
    %250 = vmatmul.mubr.bf16.gmra.mrb[0].mxu0 %v111
    %v251 = vpop.f32.mrb[0].mxu0
    %v252 = vadd.f32 0.0, %v251
    %v253 = vpop.f32.mrb[0].mxu0
    %v254 = vpop.f32.mrb[0].mxu0
    %v255 = vadd.f32 0.0, %v254
    %v256 = vpop.f32.mrb[0].mxu0
    %257 = vmatprep.mubr.bf16.mxu0 0
    %258 = vmatmul.mubr.bf16.gmra.mrb[0].mxu0 %v112
    %v259 = vpop.f32.mrb[0].mxu0
    %v260 = vadd.f32 0.0, %v259
    %v261 = vpop.f32.mrb[0].mxu0
    %v262 = vpop.f32.mrb[0].mxu0
    %v263 = vadd.f32 0.0, %v262
    %v264 = vpop.f32.mrb[0].mxu0
    %265 = vdwg.mxu0
    %v266 = vpack.c.bf16 %v207, %v204
    %v267 = vpack.c.bf16 %v215, %v212
    %v268 = vpack.c.bf16 %v223, %v220
    %v269 = vpack.c.bf16 %v231, %v228
    %v270 = vpack.c.bf16 %v239, %v236
    %v271 = vpack.c.bf16 %v247, %v244
    %v272 = vpack.c.bf16 %v255, %v252
    %v273 = vpack.c.bf16 %v263, %v260
    %v282 = vunpack.c.l.b16 %v266
    %v283 = vunpack.c.h.b16 %v266
    %v284 = vunpack.c.l.b16 %v267
    %v285 = vunpack.c.h.b16 %v267
    %v286 = vunpack.c.l.b16 %v268
    %v287 = vunpack.c.h.b16 %v268
    %v288 = vunpack.c.l.b16 %v269
    %v289 = vunpack.c.h.b16 %v269
    %v290 = vunpack.c.l.b16 %v270
    %v291 = vunpack.c.h.b16 %v270
    %v292 = vunpack.c.l.b16 %v271
    %v293 = vunpack.c.h.b16 %v271
    %v294 = vunpack.c.l.b16 %v272
    %v295 = vunpack.c.h.b16 %v272
    %v296 = vunpack.c.l.b16 %v273
    %v297 = vunpack.c.h.b16 %v273
    %v298 = vpack.c.b16 %v282, %v282
    %v299 = vpack.c.b16 %v283, %v283
    %v300 = vpack.c.b16 %v284, %v284
    %v301 = vpack.c.b16 %v285, %v285
    %v302 = vpack.c.b16 %v286, %v286
    %v303 = vpack.c.b16 %v287, %v287
    %v304 = vpack.c.b16 %v288, %v288
    %v305 = vpack.c.b16 %v289, %v289
    %v306 = vpack.c.b16 %v290, %v290
    %v307 = vpack.c.b16 %v291, %v291
    %v308 = vpack.c.b16 %v292, %v292
    %v309 = vpack.c.b16 %v293, %v293
    %v310 = vpack.c.b16 %v294, %v294
    %v311 = vpack.c.b16 %v295, %v295
    %v312 = vpack.c.b16 %v296, %v296
    %v313 = vpack.c.b16 %v297, %v297
    %330 = vst [vmem:[#allocation7] sm:$0xf] %v298
    %331 = vst [vmem:[#allocation7 + $0x4] sm:$0xf] %v299
    %332 = vst [vmem:[#allocation7 + $0x8] sm:$0xf] %v300
    %333 = vst [vmem:[#allocation7 + $0xc] sm:$0xf] %v301
    %334 = vst [vmem:[#allocation7 + $0x10] sm:$0xf] %v302
    %335 = vst [vmem:[#allocation7 + $0x14] sm:$0xf] %v303
    %336 = vst [vmem:[#allocation7 + $0x18] sm:$0xf] %v304
    %337 = vst [vmem:[#allocation7 + $0x1c] sm:$0xf] %v305
    %338 = vst [vmem:[#allocation7 + $0x20] sm:$0xf] %v306
    %339 = vst [vmem:[#allocation7 + $0x24] sm:$0xf] %v307
    %340 = vst [vmem:[#allocation7 + $0x28] sm:$0xf] %v308
    %341 = vst [vmem:[#allocation7 + $0x2c] sm:$0xf] %v309
    %342 = vst [vmem:[#allocation7 + $0x30] sm:$0xf] %v310
    %343 = vst [vmem:[#allocation7 + $0x34] sm:$0xf] %v311
    %344 = vst [vmem:[#allocation7 + $0x38] sm:$0xf] %v312
    %345 = vst [vmem:[#allocation7 + $0x3c] sm:$0xf] %v313
    // Predicated region
    $region18: #{tpu_custom_call.1} parent=1 // pred_check
      _
    $region19: #{tpu_custom_call.1} parent=1 // pred_check_branch
      %347 = sbr.rel (0) target = $region21
    $region20: #{tpu_custom_call.1} parent=1 // pred_region
      %s349 = ssub.s32 1024, 1024
      %350 = vsyncadd [#allocation4], %s349
      %s351 = sshll.u32 [#allocation7], 4
      %s352 = int_to_ptr.vmem [resolvable:$true] %s351
      %357 = dma.vmem_to_hbm [thread:$0]  %s352, 1024, %s2, [#allocation4], 64, 64, 4
    $region21: #{tpu_custom_call.1} parent=1 // pred_fallthru
      _
    // Predicated region
    $region22: #{tpu_custom_call.1} parent=1 // pred_check
      _
    $region23: #{tpu_custom_call.1} parent=1 // pred_check_branch
      %359 = sbr.rel (0) target = $region25
    $region24: #{tpu_custom_call.1} parent=1 // pred_region
      %360 = dma.done [#allocation4], 1024
    $region25: #{tpu_custom_call.1} parent=1 // pred_fallthru
      _
    %361 = vsyncpa [#allocation3], 1
    %362 = vsyncpa [#allocation6], 1
    %363 = vsyncpa [#allocation4], 1

// kernel: tpu_custom_call.1
$region0: #{tpu_custom_call.1}
  #allocation0 [shape = 'u32[]', space=smem, size = 0x4, offset = 0x4, fixed_abs, tag = 'smem constant byte address 0x4 - core index']
  #allocation1 [shape = 'u32[144,128]{1,0:T(1,128)}', space=vmem, size = 0x12000, scoped, tag = 'internal scratch']
  %s0 = inlined_call_operand.hbm [shape: bf16[128,128], index: 0, kind: input, shape index: {}]
  %s1 = inlined_call_operand.hbm [shape: bf16[128,128], index: 1, kind: input, shape index: {}]
  %s2 = inlined_call_operand.hbm [shape: bf16[128,128], index: 2, kind: output, shape index: {}]
  %s3 = sld [smem:[#allocation0]]
  $region26: #{tpu_custom_call.1} parent=0
    _
  %s5 = ssub.s32 1, %s3
  %s6 = scalar_select 0, %s5, %s3
  $region1: #{tpu_custom_call.1} parent=0
    #allocation2 [shape = 'u8[32768]{0}', space=vmem, size = 0x8000, scoped, tag = 'input window, operand 0, single buffered']
    #allocation3 [shape = 's32[1]{0}', space=sflag, size = 0x4, scoped, tag = 'scoped memory for tpu_custom_call.1']
    #allocation4 [shape = 's32[1]{0}', space=sflag, size = 0x4, scoped, tag = 'scoped memory for tpu_custom_call.1']
    #allocation5 [shape = 'u8[32768]{0}', space=vmem, size = 0x8000, scoped, tag = 'input window, operand 1, single buffered']
    #allocation6 [shape = 's32[1]{0}', space=sflag, size = 0x4, scoped, tag = 'scoped memory for tpu_custom_call.1']
    #allocation7 [shape = 'u8[32768]{0}', space=vmem, size = 0x8000, scoped, tag = 'output window, operand 0, single buffered']
    %7 = vsyncpa [#allocation3], 0
    %8 = vsyncpa [#allocation6], 0
    %9 = vsyncpa [#allocation4], 0
    // Predicated region
    $region2: #{tpu_custom_call.1} parent=1 // pred_check
      _
    $region3: #{tpu_custom_call.1} parent=1 // pred_check_branch
      %11 = sbr.rel (0) target = $region5
    $region4: #{tpu_custom_call.1} parent=1 // pred_region
      %s13 = ssub.s32 1024, 1024
      %14 = vsyncadd [#allocation3], %s13
      %s15 = sshll.u32 [#allocation2], 4
      %s16 = int_to_ptr.vmem [resolvable:$true] %s15
      %21 = dma.hbm_to_vmem [thread:$0]  %s0, 1024, %s16, [#allocation3], 64, 64, 4
    $region5: #{tpu_custom_call.1} parent=1 // pred_fallthru
      _
    // Predicated region
    $region6: #{tpu_custom_call.1} parent=1 // pred_check
      _
    $region7: #{tpu_custom_call.1} parent=1 // pred_check_branch
      %23 = sbr.rel (0) target = $region9
    $region8: #{tpu_custom_call.1} parent=1 // pred_region
      %s25 = ssub.s32 1024, 1024
      %26 = vsyncadd [#allocation6], %s25
      %s27 = sshll.u32 [#allocation5], 4
      %s28 = int_to_ptr.vmem [resolvable:$true] %s27
      %33 = dma.hbm_to_vmem [thread:$0]  %s1, 1024, %s28, [#allocation6], 64, 64, 4
    $region9: #{tpu_custom_call.1} parent=1 // pred_fallthru
      _
    // Predicated region
    $region10: #{tpu_custom_call.1} parent=1 // pred_check
      _
    $region11: #{tpu_custom_call.1} parent=1 // pred_check_branch
      %35 = sbr.rel (0) target = $region13
    $region12: #{tpu_custom_call.1} parent=1 // pred_region
      %36 = dma.done [#allocation3], 1024
    $region13: #{tpu_custom_call.1} parent=1 // pred_fallthru
      _
    // Predicated region
    $region14: #{tpu_custom_call.1} parent=1 // pred_check
      _
    $region15: #{tpu_custom_call.1} parent=1 // pred_check_branch
      %38 = sbr.rel (0) target = $region17
    $region16: #{tpu_custom_call.1} parent=1 // pred_region
      %39 = dma.done [#allocation6], 1024
    $region17: #{tpu_custom_call.1} parent=1 // pred_fallthru
      _
    %v41 = vld [vmem:[#allocation2] sm:$0xf]
    %v42 = vld [vmem:[#allocation2 + $0x4] sm:$0xf]
    %v43 = vld [vmem:[#allocation2 + $0x8] sm:$0xf]
    %v44 = vld [vmem:[#allocation2 + $0xc] sm:$0xf]
    %v45 = vld [vmem:[#allocation2 + $0x10] sm:$0xf]
    %v46 = vld [vmem:[#allocation2 + $0x14] sm:$0xf]
    %v47 = vld [vmem:[#allocation2 + $0x18] sm:$0xf]
    %v48 = vld [vmem:[#allocation2 + $0x1c] sm:$0xf]
    %v49 = vld [vmem:[#allocation2 + $0x20] sm:$0xf]
    %v50 = vld [vmem:[#allocation2 + $0x24] sm:$0xf]
    %v51 = vld [vmem:[#allocation2 + $0x28] sm:$0xf]
    %v52 = vld [vmem:[#allocation2 + $0x2c] sm:$0xf]
    %v53 = vld [vmem:[#allocation2 + $0x30] sm:$0xf]
    %v54 = vld [vmem:[#allocation2 + $0x34] sm:$0xf]
    %v55 = vld [vmem:[#allocation2 + $0x38] sm:$0xf]
    %v56 = vld [vmem:[#allocation2 + $0x3c] sm:$0xf]
    %v57 = vld [vmem:[#allocation5] sm:$0xf]
    %v58 = vld [vmem:[#allocation5 + $0x4] sm:$0xf]
    %v59 = vld [vmem:[#allocation5 + $0x8] sm:$0xf]
    %v60 = vld [vmem:[#allocation5 + $0xc] sm:$0xf]
    %v61 = vld [vmem:[#allocation5 + $0x10] sm:$0xf]
    %v62 = vld [vmem:[#allocation5 + $0x14] sm:$0xf]
    %v63 = vld [vmem:[#allocation5 + $0x18] sm:$0xf]
    %v64 = vld [vmem:[#allocation5 + $0x1c] sm:$0xf]
    %v65 = vld [vmem:[#allocation5 + $0x20] sm:$0xf]
    %v66 = vld [vmem:[#allocation5 + $0x24] sm:$0xf]
    %v67 = vld [vmem:[#allocation5 + $0x28] sm:$0xf]
    %v68 = vld [vmem:[#allocation5 + $0x2c] sm:$0xf]
    %v69 = vld [vmem:[#allocation5 + $0x30] sm:$0xf]
    %v70 = vld [vmem:[#allocation5 + $0x34] sm:$0xf]
    %v71 = vld [vmem:[#allocation5 + $0x38] sm:$0xf]
    %v72 = vld [vmem:[#allocation5 + $0x3c] sm:$0xf]
    %v89 = vunpack.c.l.b16 %v41
    %v90 = vunpack.c.l.b16 %v42
    %v91 = vunpack.c.l.b16 %v43
    %v92 = vunpack.c.l.b16 %v44
    %v93 = vunpack.c.l.b16 %v45
    %v94 = vunpack.c.l.b16 %v46
    %v95 = vunpack.c.l.b16 %v47
    %v96 = vunpack.c.l.b16 %v48
    %v97 = vunpack.c.l.b16 %v49
    %v98 = vunpack.c.l.b16 %v50
    %v99 = vunpack.c.l.b16 %v51
    %v100 = vunpack.c.l.b16 %v52
    %v101 = vunpack.c.l.b16 %v53
    %v102 = vunpack.c.l.b16 %v54
    %v103 = vunpack.c.l.b16 %v55
    %v104 = vunpack.c.l.b16 %v56
    %v105 = vpack.c.b16 %v90, %v89
    %v106 = vpack.c.b16 %v92, %v91
    %v107 = vpack.c.b16 %v94, %v93
    %v108 = vpack.c.b16 %v96, %v95
    %v109 = vpack.c.b16 %v98, %v97
    %v110 = vpack.c.b16 %v100, %v99
    %v111 = vpack.c.b16 %v102, %v101
    %v112 = vpack.c.b16 %v104, %v103
    %v137 = vunpack.c.l.b16 %v57
    %v138 = vunpack.c.l.b16 %v58
    %v139 = vunpack.c.l.b16 %v59
    %v140 = vunpack.c.l.b16 %v60
    %v141 = vunpack.c.l.b16 %v61
    %v142 = vunpack.c.l.b16 %v62
    %v143 = vunpack.c.l.b16 %v63
    %v144 = vunpack.c.l.b16 %v64
    %v145 = vunpack.c.l.b16 %v65
    %v146 = vunpack.c.l.b16 %v66
    %v147 = vunpack.c.l.b16 %v67
    %v148 = vunpack.c.l.b16 %v68
    %v149 = vunpack.c.l.b16 %v69
    %v150 = vunpack.c.l.b16 %v70
    %v151 = vunpack.c.l.b16 %v71
    %v152 = vunpack.c.l.b16 %v72
    %v153 = vpack.c.b16 %v138, %v137
    %v154 = vpack.c.b16 %v140, %v139
    %v155 = vpack.c.b16 %v142, %v141
    %v156 = vpack.c.b16 %v144, %v143
    %v157 = vpack.c.b16 %v146, %v145
    %v158 = vpack.c.b16 %v148, %v147
    %v159 = vpack.c.b16 %v150, %v149
    %v160 = vpack.c.b16 %v152, %v151
    %169 = vmatprep.subr.bf16.mxu0 0
    %170 = vmatpush1.bf16.msra.mxu0 %v153
    %171 = vmatprep.subr.bf16.mxu0 0
    %172 = vmatpush1.bf16.msra.mxu0 %v154
    %173 = vmatprep.subr.bf16.mxu0 0
    %174 = vmatpush1.bf16.msra.mxu0 %v155
    %175 = vmatprep.subr.bf16.mxu0 0
    %176 = vmatpush1.bf16.msra.mxu0 %v156
    %177 = vmatprep.subr.bf16.mxu0 0
    %178 = vmatpush1.bf16.msra.mxu0 %v157
    %179 = vmatprep.subr.bf16.mxu0 0
    %180 = vmatpush1.bf16.msra.mxu0 %v158
    %181 = vmatprep.subr.bf16.mxu0 0
    %182 = vmatpush1.bf16.msra.mxu0 %v159
    %183 = vmatprep.subr.bf16.mxu0 0
    %184 = vmatpush1.bf16.msra.mxu0 %v160
    %185 = vmatprep.subr.bf16.mxu0 0
    %186 = vmatpush1.bf16.msra.mxu0 0
    %187 = vmatprep.subr.bf16.mxu0 0
    %188 = vmatpush1.bf16.msra.mxu0 0
    %189 = vmatprep.subr.bf16.mxu0 0
    %190 = vmatpush1.bf16.msra.mxu0 0
    %191 = vmatprep.subr.bf16.mxu0 0
    %192 = vmatpush1.bf16.msra.mxu0 0
    %193 = vmatprep.subr.bf16.mxu0 0
    %194 = vmatpush1.bf16.msra.mxu0 0
    %195 = vmatprep.subr.bf16.mxu0 0
    %196 = vmatpush1.bf16.msra.mxu0 0
    %197 = vmatprep.subr.bf16.mxu0 0
    %198 = vmatpush1.bf16.msra.mxu0 0
    %199 = vmatprep.subr.bf16.mxu0 0
    %200 = vmatpush1.bf16.msra.mxu0 0
    %201 = vmatprep.mubr.bf16.mxu0 0
    %202 = vmatmul.mubr.bf16.gmra.mrb[0].mxu0 %v105
    %v203 = vpop.f32.mrb[0].mxu0
    %v204 = vadd.f32 0.0, %v203
    %v205 = vpop.f32.mrb[0].mxu0
    %v206 = vpop.f32.mrb[0].mxu0
    %v207 = vadd.f32 0.0, %v206
    %v208 = vpop.f32.mrb[0].mxu0
    %209 = vmatprep.mubr.bf16.mxu0 0
    %210 = vmatmul.mubr.bf16.gmra.mrb[0].mxu0 %v106
    %v211 = vpop.f32.mrb[0].mxu0
    %v212 = vadd.f32 0.0, %v211
    %v213 = vpop.f32.mrb[0].mxu0
    %v214 = vpop.f32.mrb[0].mxu0
    %v215 = vadd.f32 0.0, %v214
    %v216 = vpop.f32.mrb[0].mxu0
    %217 = vmatprep.mubr.bf16.mxu0 0
    %218 = vmatmul.mubr.bf16.gmra.mrb[0].mxu0 %v107
    %v219 = vpop.f32.mrb[0].mxu0
    %v220 = vadd.f32 0.0, %v219
    %v221 = vpop.f32.mrb[0].mxu0
    %v222 = vpop.f32.mrb[0].mxu0
    %v223 = vadd.f32 0.0, %v222
    %v224 = vpop.f32.mrb[0].mxu0
    %225 = vmatprep.mubr.bf16.mxu0 0
    %226 = vmatmul.mubr.bf16.gmra.mrb[0].mxu0 %v108
    %v227 = vpop.f32.mrb[0].mxu0
    %v228 = vadd.f32 0.0, %v227
    %v229 = vpop.f32.mrb[0].mxu0
    %v230 = vpop.f32.mrb[0].mxu0
    %v231 = vadd.f32 0.0, %v230
    %v232 = vpop.f32.mrb[0].mxu0
    %233 = vmatprep.mubr.bf16.mxu0 0
    %234 = vmatmul.mubr.bf16.gmra.mrb[0].mxu0 %v109
    %v235 = vpop.f32.mrb[0].mxu0
    %v236 = vadd.f32 0.0, %v235
    %v237 = vpop.f32.mrb[0].mxu0
    %v238 = vpop.f32.mrb[0].mxu0
    %v239 = vadd.f32 0.0, %v238
    %v240 = vpop.f32.mrb[0].mxu0
    %241 = vmatprep.mubr.bf16.mxu0 0
    %242 = vmatmul.mubr.bf16.gmra.mrb[0].mxu0 %v110
    %v243 = vpop.f32.mrb[0].mxu0
    %v244 = vadd.f32 0.0, %v243
    %v245 = vpop.f32.mrb[0].mxu0
    %v246 = vpop.f32.mrb[0].mxu0
    %v247 = vadd.f32 0.0, %v246
    %v248 = vpop.f32.mrb[0].mxu0
    %249 = vmatprep.mubr.bf16.mxu0 0
    %250 = vmatmul.mubr.bf16.gmra.mrb[0].mxu0 %v111
    %v251 = vpop.f32.mrb[0].mxu0
    %v252 = vadd.f32 0.0, %v251
    %v253 = vpop.f32.mrb[0].mxu0
    %v254 = vpop.f32.mrb[0].mxu0
    %v255 = vadd.f32 0.0, %v254
    %v256 = vpop.f32.mrb[0].mxu0
    %257 = vmatprep.mubr.bf16.mxu0 0
    %258 = vmatmul.mubr.bf16.gmra.mrb[0].mxu0 %v112
    %v259 = vpop.f32.mrb[0].mxu0
    %v260 = vadd.f32 0.0, %v259
    %v261 = vpop.f32.mrb[0].mxu0
    %v262 = vpop.f32.mrb[0].mxu0
    %v263 = vadd.f32 0.0, %v262
    %v264 = vpop.f32.mrb[0].mxu0
    %265 = vdwg.mxu0
    %v266 = vpack.c.bf16 %v207, %v204
    %v267 = vpack.c.bf16 %v215, %v212
    %v268 = vpack.c.bf16 %v223, %v220
    %v269 = vpack.c.bf16 %v231, %v228
    %v270 = vpack.c.bf16 %v239, %v236
    %v271 = vpack.c.bf16 %v247, %v244
    %v272 = vpack.c.bf16 %v255, %v252
    %v273 = vpack.c.bf16 %v263, %v260
    %v282 = vunpack.c.l.b16 %v266
    %v283 = vunpack.c.h.b16 %v266
    %v284 = vunpack.c.l.b16 %v267
    %v285 = vunpack.c.h.b16 %v267
    %v286 = vunpack.c.l.b16 %v268
    %v287 = vunpack.c.h.b16 %v268
    %v288 = vunpack.c.l.b16 %v269
    %v289 = vunpack.c.h.b16 %v269
    %v290 = vunpack.c.l.b16 %v270
    %v291 = vunpack.c.h.b16 %v270
    %v292 = vunpack.c.l.b16 %v271
    %v293 = vunpack.c.h.b16 %v271
    %v294 = vunpack.c.l.b16 %v272
    %v295 = vunpack.c.h.b16 %v272
    %v296 = vunpack.c.l.b16 %v273
    %v297 = vunpack.c.h.b16 %v273
    %v298 = vpack.c.b16 %v282, %v282
    %v299 = vpack.c.b16 %v283, %v283
    %v300 = vpack.c.b16 %v284, %v284
    %v301 = vpack.c.b16 %v285, %v285
    %v302 = vpack.c.b16 %v286, %v286
    %v303 = vpack.c.b16 %v287, %v287
    %v304 = vpack.c.b16 %v288, %v288
    %v305 = vpack.c.b16 %v289, %v289
    %v306 = vpack.c.b16 %v290, %v290
    %v307 = vpack.c.b16 %v291, %v291
    %v308 = vpack.c.b16 %v292, %v292
    %v309 = vpack.c.b16 %v293, %v293
    %v310 = vpack.c.b16 %v294, %v294
    %v311 = vpack.c.b16 %v295, %v295
    %v312 = vpack.c.b16 %v296, %v296
    %v313 = vpack.c.b16 %v297, %v297
    %330 = vst [vmem:[#allocation7] sm:$0xf] %v298
    %331 = vst [vmem:[#allocation7 + $0x4] sm:$0xf] %v299
    %332 = vst [vmem:[#allocation7 + $0x8] sm:$0xf] %v300
    %333 = vst [vmem:[#allocation7 + $0xc] sm:$0xf] %v301
    %334 = vst [vmem:[#allocation7 + $0x10] sm:$0xf] %v302
    %335 = vst [vmem:[#allocation7 + $0x14] sm:$0xf] %v303
    %336 = vst [vmem:[#allocation7 + $0x18] sm:$0xf] %v304
    %337 = vst [vmem:[#allocation7 + $0x1c] sm:$0xf] %v305
    %338 = vst [vmem:[#allocation7 + $0x20] sm:$0xf] %v306
    %339 = vst [vmem:[#allocation7 + $0x24] sm:$0xf] %v307
    %340 = vst [vmem:[#allocation7 + $0x28] sm:$0xf] %v308
    %341 = vst [vmem:[#allocation7 + $0x2c] sm:$0xf] %v309
    %342 = vst [vmem:[#allocation7 + $0x30] sm:$0xf] %v310
    %343 = vst [vmem:[#allocation7 + $0x34] sm:$0xf] %v311
    %344 = vst [vmem:[#allocation7 + $0x38] sm:$0xf] %v312
    %345 = vst [vmem:[#allocation7 + $0x3c] sm:$0xf] %v313
    // Predicated region
    $region18: #{tpu_custom_call.1} parent=1 // pred_check
      _
    $region19: #{tpu_custom_call.1} parent=1 // pred_check_branch
      %347 = sbr.rel (0) target = $region21
    $region20: #{tpu_custom_call.1} parent=1 // pred_region
      %s349 = ssub.s32 1024, 1024
      %350 = vsyncadd [#allocation4], %s349
      %s351 = sshll.u32 [#allocation7], 4
      %s352 = int_to_ptr.vmem [resolvable:$true] %s351
      %357 = dma.vmem_to_hbm [thread:$0]  %s352, 1024, %s2, [#allocation4], 64, 64, 4
    $region21: #{tpu_custom_call.1} parent=1 // pred_fallthru
      _
    // Predicated region
    $region22: #{tpu_custom_call.1} parent=1 // pred_check
      _
    $region23: #{tpu_custom_call.1} parent=1 // pred_check_branch
      %359 = sbr.rel (0) target = $region25
    $region24: #{tpu_custom_call.1} parent=1 // pred_region
      %360 = dma.done [#allocation4], 1024
    $region25: #{tpu_custom_call.1} parent=1 // pred_fallthru
      _
    %361 = vsyncpa [#allocation3], 1
    %362 = vsyncpa [#allocation6], 1
    %363 = vsyncpa [#allocation4], 1

</llo_original>
